<compile_context>
chip_gen: v6e
topology: v6e:2x2x1
jax: 0.10.0
libtpu: 0.0.40
codegen_flags: <defaults>
</compile_context>

<pallas_src>
import functools
import math

import jax
import jax.numpy as jnp
from jax import lax
from jax.experimental import pallas as pl
from jax.experimental.pallas import tpu as pltpu


def gat_fused_kernel(h_full_ref, h_dst_ref, wcat_ref, aw_src_ref, aw_dst_ref,
                     adj_ref, out_ref, *, num_heads, out_dim):
    """All GAT heads for one tile of destination nodes.

    h_full_ref : (N, Fin)        all source nodes (shared across dst tiles)
    h_dst_ref  : (T, Fin)        destination-node tile
    wcat_ref   : (H*Fout, Fin)   per-head fc weights stacked on the row axis
    aw_src_ref : (H, Fin)        a_src folded through W  (a_src @ W per head)
    aw_dst_ref : (H, Fin)        a_dst folded through W
    adj_ref    : (T, N)          0/1, adj[v, u] = 1 iff edge u -> v
    out_ref    : (T, H*Fout)     lane-dense concatenated head outputs
    """
    h_full = h_full_ref[...]
    h_dst = h_dst_ref[...]
    adj = adj_ref[...]

    # One fused MXU matmul gives every head's z for all source nodes.
    z_all = lax.dot_general(h_full, wcat_ref[...], (((1,), (1,)), ((), ())),
                            preferred_element_type=jnp.float32)      # (N, H*Fout)

    # Attention projections (folded through W in the wrapper):
    #   el_T[hd, u] = a_src_hd . z_u   (src term, src already on the lane axis)
    #   er  [v, hd] = a_dst_hd . z_v   (dst term for this dst tile)
    el_T = lax.dot_general(aw_src_ref[...], h_full, (((1,), (1,)), ((), ())),
                           preferred_element_type=jnp.float32)       # (H, N)
    er = lax.dot_general(h_dst, aw_dst_ref[...], (((1,), (1,)), ((), ())),
                         preferred_element_type=jnp.float32)         # (T, H)

    # Additive mask for the row max: 0 on edges, -1e30 on non-edges.
    neg_bias = (adj - 1.0) * 1e30                                    # (T, N)

    for hd in range(num_heads):  # static unroll, H is small
        # e[v, u] = leaky_relu(a_src.z_u + a_dst.z_v)
        e = er[:, hd:hd + 1] + el_T[hd:hd + 1, :]                    # (T, N)
        e = jnp.maximum(e, 0.01 * e)                                 # leaky_relu

        # Masked softmax over incoming edges (lane-axis reduce), mask fused
        # into the exp via the 0/1 adjacency.  The clamp keeps masked lanes
        # finite (0 * finite = 0) even for rows with no edges.
        m = jnp.max(e + neg_bias, axis=-1, keepdims=True)            # (T, 1)
        p = adj * jnp.exp(jnp.minimum(e - m, 0.0))                   # (T, N)
        denom = jnp.maximum(jnp.sum(p, axis=-1, keepdims=True), 1e-30)

        # Aggregate un-normalized (standard-layout MXU matmul), then scale by
        # a per-dst reciprocal: T values instead of T*N divisions.
        agg = jnp.dot(p, z_all[:, hd * out_dim:(hd + 1) * out_dim],
                      preferred_element_type=jnp.float32)            # (T, Fout)
        inv = pl.reciprocal(denom, approx=True)                      # EUP slot
        inv = inv * (2.0 - denom * inv)                              # Newton step
        out_ref[:, hd * out_dim:(hd + 1) * out_dim] = agg * inv


def multi_head_gat(h, adj_ds, W, a_src, a_dst, merge="cat", tile_dst=256):
    """h: (N, Fin); adj_ds: (N, N) with adj_ds[v,u]=1 iff edge u->v;
    W: (H, Fout, Fin); a_src/a_dst: (H, Fout)."""
    H, Fout, Fin = W.shape
    N = h.shape[0]
    HF = H * Fout

    # Fold the attention vectors through the fc weights once on the host side:
    #   a . z_u = a . (W h_u) = h_u @ (a @ W)^T
    aw_src = jnp.einsum("ho,hof->hf", a_src, W)      # (H, Fin)
    aw_dst = jnp.einsum("ho,hof->hf", a_dst, W)      # (H, Fin)
    w_cat = W.reshape(HF, Fin)                       # (H*Fout, Fin)

    # Destination-node tiling (whole graph when small; 8-aligned tiles at scale).
    T = N if N <= tile_dst else tile_dst
    assert N % T == 0, "N must be a multiple of the dst tile size"
    grid = (N // T,)

    kernel = functools.partial(gat_fused_kernel, num_heads=H, out_dim=Fout)

    out = pl.pallas_call(
        kernel,
        out_shape=jax.ShapeDtypeStruct((N, HF), jnp.float32),
        grid=grid,
        in_specs=[
            pl.BlockSpec((N, Fin), lambda i: (0, 0)),    # h, all source nodes
            pl.BlockSpec((T, Fin), lambda i: (i, 0)),    # h, dst-node tile
            pl.BlockSpec((HF, Fin), lambda i: (0, 0)),   # stacked head weights
            pl.BlockSpec((H, Fin), lambda i: (0, 0)),    # folded a_src
            pl.BlockSpec((H, Fin), lambda i: (0, 0)),    # folded a_dst
            pl.BlockSpec((T, N), lambda i: (i, 0)),      # in-edge adjacency tile
        ],
        out_specs=pl.BlockSpec((T, HF), lambda i: (i, 0)),   # lane-dense output
        compiler_params=pltpu.CompilerParams(
            dimension_semantics=("parallel",),               # dst tiles independent
            vmem_limit_bytes=64 * 1024 * 1024),
    )(h, h, w_cat, aw_src, aw_dst, adj_ds)

    if merge == "cat":
        return out                    # already (N, H*Fout) == torch.cat(dim=1)
    # Mirrors the reference module's torch.mean(torch.stack(head_out)) (scalar).
    return jnp.mean(out)


def gat_reference(h, adj_ds, W, a_src, a_dst):
    """Pure-JAX reference of the DGL GAT forward (dense in-edge adjacency)."""
    outs = []
    for hd in range(W.shape[0]):
        z = h @ W[hd].T                               # (N, Fout)
        el = z @ a_src[hd]                            # (N,) src term
        er = z @ a_dst[hd]                            # (N,) dst term
        e = er[:, None] + el[None, :]                 # (N_dst, N_src)
        e = jnp.where(e >= 0, e, 0.01 * e)
        mask = adj_ds > 0
        logits = jnp.where(mask, e, -1e30)
        p = jnp.where(mask, jnp.exp(logits - logits.max(axis=1, keepdims=True)), 0.0)
        alpha = p / p.sum(axis=1, keepdims=True)
        outs.append(alpha @ z)                        # (N, Fout)
    return jnp.concatenate(outs, axis=1)


if __name__ == "__main__":
    N, IN_DIM, OUT_DIM, NUM_HEADS = 8, 16, 8, 2

    key = jax.random.PRNGKey(0)
    k_h, k_adj, k_w, k_a = jax.random.split(key, 4)

    # Node features.
    h = jax.random.normal(k_h, (N, IN_DIM), dtype=jnp.float32)

    # Random directed graph + self loops, stored in (dst, src) orientation:
    # adj_ds[v, u] = 1 iff edge u -> v (every node has >= 1 incoming edge).
    adj_rand = (jax.random.uniform(k_adj, (N, N)) < 0.3).astype(jnp.float32)
    adj_ds = jnp.clip(adj_rand + jnp.eye(N, dtype=jnp.float32), 0.0, 1.0)

    # Deterministic parameter init mirroring xavier_normal_ with gain for relu.
    gain = math.sqrt(2.0)
    w_std = gain * math.sqrt(2.0 / (IN_DIM + OUT_DIM))
    a_std = gain * math.sqrt(2.0 / (2 * OUT_DIM + 1))
    W = w_std * jax.random.normal(k_w, (NUM_HEADS, OUT_DIM, IN_DIM), dtype=jnp.float32)
    a_full = a_std * jax.random.normal(k_a, (NUM_HEADS, 2 * OUT_DIM), dtype=jnp.float32)
    a_src = a_full[:, :OUT_DIM]   # (H, Fout), acts on src z
    a_dst = a_full[:, OUT_DIM:]   # (H, Fout), acts on dst z

    out = multi_head_gat(h, adj_ds, W, a_src, a_dst, merge="cat")
    out = jax.block_until_ready(out)

    ref = gat_reference(h, adj_ds, W, a_src, a_dst)
    assert out.shape == (N, NUM_HEADS * OUT_DIM)
    assert jnp.allclose(out, ref, atol=1e-4, rtol=1e-4), "mismatch vs reference"

    print("KERNEL_OK")
</pallas_src>

<mosaic_0001>
module attributes {stable_mosaic.version = 11 : i64} {
  func.func @gat_fused_kernel(%arg0: i32, %arg1: memref<8x16xf32, #tpu.memory_space<vmem>>, %arg2: memref<8x16xf32, #tpu.memory_space<vmem>>, %arg3: memref<16x16xf32, #tpu.memory_space<vmem>>, %arg4: memref<2x16xf32, #tpu.memory_space<vmem>>, %arg5: memref<2x16xf32, #tpu.memory_space<vmem>>, %arg6: memref<8x8xf32, #tpu.memory_space<vmem>>, %arg7: memref<8x16xf32, #tpu.memory_space<vmem>>) attributes {dimension_semantics = [#tpu.dimension_semantics<parallel>], iteration_bounds = array<i64: 1>, scalar_prefetch = 0 : i64, scratch_operands = 0 : i64, tpu.core_type = #tpu.core_type<tc>, window_params = [{pipeline_mode = #tpu.pipeline_mode<synchronous>, transform_indices = @transform_0, window_bounds = array<i64: 8, 16>}, {transform_indices = @transform_1, window_bounds = array<i64: 8, 16>}, {pipeline_mode = #tpu.pipeline_mode<synchronous>, transform_indices = @transform_2, window_bounds = array<i64: 16, 16>}, {pipeline_mode = #tpu.pipeline_mode<synchronous>, transform_indices = @transform_3, window_bounds = array<i64: 2, 16>}, {pipeline_mode = #tpu.pipeline_mode<synchronous>, transform_indices = @transform_4, window_bounds = array<i64: 2, 16>}, {transform_indices = @transform_5, window_bounds = array<i64: 8, 8>}, {transform_indices = @transform_6, window_bounds = array<i64: 8, 16>}]} {
    %c0 = arith.constant 0 : index
    %c0_0 = arith.constant 0 : index
    %0 = vector.load %arg1[%c0, %c0_0] : memref<8x16xf32, #tpu.memory_space<vmem>>, vector<8x16xf32>
    %c0_1 = arith.constant 0 : index
    %c0_2 = arith.constant 0 : index
    %1 = vector.load %arg2[%c0_1, %c0_2] : memref<8x16xf32, #tpu.memory_space<vmem>>, vector<8x16xf32>
    %c0_3 = arith.constant 0 : index
    %c0_4 = arith.constant 0 : index
    %2 = vector.load %arg6[%c0_3, %c0_4] : memref<8x8xf32, #tpu.memory_space<vmem>>, vector<8x8xf32>
    %c0_5 = arith.constant 0 : index
    %c0_6 = arith.constant 0 : index
    %3 = vector.load %arg3[%c0_5, %c0_6] : memref<16x16xf32, #tpu.memory_space<vmem>>, vector<16x16xf32>
    %cst = arith.constant dense<0.000000e+00> : vector<8x16xf32>
    %4 = tpu.matmul %0, %3, %cst {dimension_numbers = #tpu.dot_dimension_numbers<[1], [1], [0], [0], [0, 0, 1, 0], [], []>} : vector<8x16xf32>, vector<16x16xf32>, vector<8x16xf32> -> vector<8x16xf32>
    %c0_7 = arith.constant 0 : index
    %c0_8 = arith.constant 0 : index
    %5 = vector.load %arg4[%c0_7, %c0_8] : memref<2x16xf32, #tpu.memory_space<vmem>>, vector<2x16xf32>
    %cst_9 = arith.constant dense<0.000000e+00> : vector<2x8xf32>
    %6 = tpu.matmul %5, %0, %cst_9 {dimension_numbers = #tpu.dot_dimension_numbers<[1], [1], [0], [0], [0, 0, 1, 0], [], []>} : vector<2x16xf32>, vector<8x16xf32>, vector<2x8xf32> -> vector<2x8xf32>
    %c0_10 = arith.constant 0 : index
    %c0_11 = arith.constant 0 : index
    %7 = vector.load %arg5[%c0_10, %c0_11] : memref<2x16xf32, #tpu.memory_space<vmem>>, vector<2x16xf32>
    %cst_12 = arith.constant dense<0.000000e+00> : vector<8x2xf32>
    %8 = tpu.matmul %1, %7, %cst_12 {dimension_numbers = #tpu.dot_dimension_numbers<[1], [1], [0], [0], [0, 0, 1, 0], [], []>} : vector<8x16xf32>, vector<2x16xf32>, vector<8x2xf32> -> vector<8x2xf32>
    %cst_13 = arith.constant 1.000000e+00 : f32
    %9 = vector.broadcast %cst_13 : f32 to vector<8x8xf32>
    %10 = arith.subf %2, %9 : vector<8x8xf32>
    %cst_14 = arith.constant 1.000000e+30 : f32
    %11 = vector.broadcast %cst_14 : f32 to vector<8x8xf32>
    %12 = arith.mulf %10, %11 : vector<8x8xf32>
    %13 = vector.extract_strided_slice %8 {offsets = [0, 0], sizes = [8, 1], strides = [1, 1]} : vector<8x2xf32> to vector<8x1xf32>
    %14 = vector.extract_strided_slice %6 {offsets = [0, 0], sizes = [1, 8], strides = [1, 1]} : vector<2x8xf32> to vector<1x8xf32>
    %15 = vector.broadcast %13 : vector<8x1xf32> to vector<8x8xf32>
    %16 = vector.broadcast %14 : vector<1x8xf32> to vector<8x8xf32>
    %17 = arith.addf %15, %16 : vector<8x8xf32>
    %cst_15 = arith.constant 0.00999999977 : f32
    %18 = vector.broadcast %cst_15 : f32 to vector<8x8xf32>
    %19 = arith.mulf %18, %17 : vector<8x8xf32>
    %20 = arith.maximumf %17, %19 : vector<8x8xf32>
    %21 = arith.addf %20, %12 : vector<8x8xf32>
    %cst_16 = arith.constant dense<0xFF800000> : vector<8xf32>
    %22 = vector.multi_reduction <maximumf>, %21, %cst_16 [1] : vector<8x8xf32> to vector<8xf32>
    %23 = vector.shape_cast %22 : vector<8xf32> to vector<8x1xf32>
    %24 = vector.broadcast %23 : vector<8x1xf32> to vector<8x8xf32>
    %25 = arith.subf %20, %24 : vector<8x8xf32>
    %cst_17 = arith.constant 0.000000e+00 : f32
    %26 = vector.broadcast %cst_17 : f32 to vector<8x8xf32>
    %27 = arith.minimumf %25, %26 : vector<8x8xf32>
    %28 = math.exp %27 : vector<8x8xf32>
    %29 = arith.mulf %2, %28 : vector<8x8xf32>
    %cst_18 = arith.constant dense<0.000000e+00> : vector<8xf32>
    %30 = vector.multi_reduction <add>, %29, %cst_18 [1] : vector<8x8xf32> to vector<8xf32>
    %31 = vector.shape_cast %30 : vector<8xf32> to vector<8x1xf32>
    %cst_19 = arith.constant 1.000000e-30 : f32
    %32 = vector.broadcast %cst_19 : f32 to vector<8x1xf32>
    %33 = arith.maximumf %31, %32 : vector<8x1xf32>
    %34 = vector.extract_strided_slice %4 {offsets = [0, 0], sizes = [8, 8], strides = [1, 1]} : vector<8x16xf32> to vector<8x8xf32>
    %cst_20 = arith.constant dense<0.000000e+00> : vector<8x8xf32>
    %35 = tpu.matmul %29, %34, %cst_20 {dimension_numbers = #tpu.dot_dimension_numbers<[1], [0], [0], [1], [0, 0, 1, 1], [], []>} : vector<8x8xf32>, vector<8x8xf32>, vector<8x8xf32> -> vector<8x8xf32>
    %36 = tpu.reciprocal %33 {approx = true} : vector<8x1xf32> -> vector<8x1xf32>
    %37 = arith.mulf %33, %36 : vector<8x1xf32>
    %cst_21 = arith.constant 2.000000e+00 : f32
    %38 = vector.broadcast %cst_21 : f32 to vector<8x1xf32>
    %39 = arith.subf %38, %37 : vector<8x1xf32>
    %40 = arith.mulf %36, %39 : vector<8x1xf32>
    %41 = vector.broadcast %40 : vector<8x1xf32> to vector<8x8xf32>
    %42 = arith.mulf %35, %41 : vector<8x8xf32>
    %c0_22 = arith.constant 0 : index
    %c0_23 = arith.constant 0 : index
    %43 = vector.load %arg7[%c0_22, %c0_23] : memref<8x16xf32, #tpu.memory_space<vmem>>, vector<8x8xf32>
    tpu.vector_store %arg7[%c0_22, %c0_23], %42 {strides = array<i32>} : memref<8x16xf32, #tpu.memory_space<vmem>>, vector<8x8xf32>,
    %44 = vector.extract_strided_slice %8 {offsets = [0, 1], sizes = [8, 1], strides = [1, 1]} : vector<8x2xf32> to vector<8x1xf32>
    %45 = vector.extract_strided_slice %6 {offsets = [1, 0], sizes = [1, 8], strides = [1, 1]} : vector<2x8xf32> to vector<1x8xf32>
    %46 = vector.broadcast %44 : vector<8x1xf32> to vector<8x8xf32>
    %47 = vector.broadcast %45 : vector<1x8xf32> to vector<8x8xf32>
    %48 = arith.addf %46, %47 : vector<8x8xf32>
    %cst_24 = arith.constant 0.00999999977 : f32
    %49 = vector.broadcast %cst_24 : f32 to vector<8x8xf32>
    %50 = arith.mulf %49, %48 : vector<8x8xf32>
    %51 = arith.maximumf %48, %50 : vector<8x8xf32>
    %52 = arith.addf %51, %12 : vector<8x8xf32>
    %cst_25 = arith.constant dense<0xFF800000> : vector<8xf32>
    %53 = vector.multi_reduction <maximumf>, %52, %cst_25 [1] : vector<8x8xf32> to vector<8xf32>
    %54 = vector.shape_cast %53 : vector<8xf32> to vector<8x1xf32>
    %55 = vector.broadcast %54 : vector<8x1xf32> to vector<8x8xf32>
    %56 = arith.subf %51, %55 : vector<8x8xf32>
    %cst_26 = arith.constant 0.000000e+00 : f32
    %57 = vector.broadcast %cst_26 : f32 to vector<8x8xf32>
    %58 = arith.minimumf %56, %57 : vector<8x8xf32>
    %59 = math.exp %58 : vector<8x8xf32>
    %60 = arith.mulf %2, %59 : vector<8x8xf32>
    %cst_27 = arith.constant dense<0.000000e+00> : vector<8xf32>
    %61 = vector.multi_reduction <add>, %60, %cst_27 [1] : vector<8x8xf32> to vector<8xf32>
    %62 = vector.shape_cast %61 : vector<8xf32> to vector<8x1xf32>
    %cst_28 = arith.constant 1.000000e-30 : f32
    %63 = vector.broadcast %cst_28 : f32 to vector<8x1xf32>
    %64 = arith.maximumf %62, %63 : vector<8x1xf32>
    %65 = vector.extract_strided_slice %4 {offsets = [0, 8], sizes = [8, 8], strides = [1, 1]} : vector<8x16xf32> to vector<8x8xf32>
    %cst_29 = arith.constant dense<0.000000e+00> : vector<8x8xf32>
    %66 = tpu.matmul %60, %65, %cst_29 {dimension_numbers = #tpu.dot_dimension_numbers<[1], [0], [0], [1], [0, 0, 1, 1], [], []>} : vector<8x8xf32>, vector<8x8xf32>, vector<8x8xf32> -> vector<8x8xf32>
    %67 = tpu.reciprocal %64 {approx = true} : vector<8x1xf32> -> vector<8x1xf32>
    %68 = arith.mulf %64, %67 : vector<8x1xf32>
    %cst_30 = arith.constant 2.000000e+00 : f32
    %69 = vector.broadcast %cst_30 : f32 to vector<8x1xf32>
    %70 = arith.subf %69, %68 : vector<8x1xf32>
    %71 = arith.mulf %67, %70 : vector<8x1xf32>
    %72 = vector.broadcast %71 : vector<8x1xf32> to vector<8x8xf32>
    %73 = arith.mulf %66, %72 : vector<8x8xf32>
    %c0_31 = arith.constant 0 : index
    %c8 = arith.constant 8 : index
    %74 = vector.load %arg7[%c0_31, %c8] : memref<8x16xf32, #tpu.memory_space<vmem>>, vector<8x8xf32>
    tpu.vector_store %arg7[%c0_31, %c8], %73 {strides = array<i32>} : memref<8x16xf32, #tpu.memory_space<vmem>>, vector<8x8xf32>,
    return
  }
  func.func @transform_0(%arg0: i32) -> (i32, i32) {
    %c0_i32 = arith.constant 0 : i32
    %c0_i32_0 = arith.constant 0 : i32
    %c0_i32_1 = arith.constant 0 : i32
    return %c0_i32, %c0_i32_0 : i32, i32
  }
  func.func @transform_1(%arg0: i32) -> (i32, i32) {
    %c0_i32 = arith.constant 0 : i32
    %c0_i32_0 = arith.constant 0 : i32
    return %arg0, %c0_i32 : i32, i32
  }
  func.func @transform_2(%arg0: i32) -> (i32, i32) {
    %c0_i32 = arith.constant 0 : i32
    %c0_i32_0 = arith.constant 0 : i32
    %c0_i32_1 = arith.constant 0 : i32
    return %c0_i32, %c0_i32_0 : i32, i32
  }
  func.func @transform_3(%arg0: i32) -> (i32, i32) {
    %c0_i32 = arith.constant 0 : i32
    %c0_i32_0 = arith.constant 0 : i32
    %c0_i32_1 = arith.constant 0 : i32
    return %c0_i32, %c0_i32_0 : i32, i32
  }
  func.func @transform_4(%arg0: i32) -> (i32, i32) {
    %c0_i32 = arith.constant 0 : i32
    %c0_i32_0 = arith.constant 0 : i32
    %c0_i32_1 = arith.constant 0 : i32
    return %c0_i32, %c0_i32_0 : i32, i32
  }
  func.func @transform_5(%arg0: i32) -> (i32, i32) {
    %c0_i32 = arith.constant 0 : i32
    %c0_i32_0 = arith.constant 0 : i32
    return %arg0, %c0_i32 : i32, i32
  }
  func.func @transform_6(%arg0: i32) -> (i32, i32) {
    %c0_i32 = arith.constant 0 : i32
    %c0_i32_0 = arith.constant 0 : i32
    return %arg0, %c0_i32 : i32, i32
  }
}

</mosaic_0001>

<llo_original>
// kernel: tpu_custom_call.1
$region0: #{tpu_custom_call.1}
  #allocation0 [shape = 'u32[]', space=smem, size = 0x4, offset = 0x4, fixed_abs, tag = 'smem constant byte address 0x4 - core index']
  #allocation1 [shape = 'u32[144,128]{1,0:T(1,128)}', space=vmem, size = 0x12000, scoped, tag = 'internal scratch']
  %s0 = inlined_call_operand.hbm [shape: f32[8,16], index: 0, kind: input, shape index: {}]
  %s1 = inlined_call_operand.hbm [shape: f32[8,16], index: 1, kind: input, shape index: {}]
  %s2 = inlined_call_operand.hbm [shape: f32[16,16], index: 2, kind: input, shape index: {}]
  %s3 = inlined_call_operand.hbm [shape: f32[2,16], index: 3, kind: input, shape index: {}]
  %s4 = inlined_call_operand.hbm [shape: f32[2,16], index: 4, kind: input, shape index: {}]
  %s5 = inlined_call_operand.vmem [shape: f32[8,8], index: 5, kind: input, shape index: {}]
  %s6 = inlined_call_operand.hbm [shape: f32[8,16], index: 6, kind: output, shape index: {}]
  %s7 = sld [smem:[#allocation0]]
  $region54: #{tpu_custom_call.1} parent=0
    _
  %s9 = ssub.s32 1, %s7
  %s10 = scalar_select 0, %s9, %s7
  $region1: #{tpu_custom_call.1} parent=0
    #allocation2 [shape = 'u8[4096]{0}', space=vmem, size = 0x1000, scoped, tag = 'input window, operand 0, single buffered']
    #allocation3 [shape = 's32[1]{0}', space=sflag, size = 0x4, scoped, tag = 'scoped memory for tpu_custom_call.1']
    #allocation4 [shape = 's32[1]{0}', space=sflag, size = 0x4, scoped, tag = 'scoped memory for tpu_custom_call.1']
    #allocation5 [shape = 'u8[4096]{0}', space=vmem, size = 0x1000, scoped, tag = 'input window, operand 1, single buffered']
    #allocation6 [shape = 's32[1]{0}', space=sflag, size = 0x4, scoped, tag = 'scoped memory for tpu_custom_call.1']
    #allocation7 [shape = 'u8[8192]{0}', space=vmem, size = 0x2000, scoped, tag = 'input window, operand 2, single buffered']
    #allocation8 [shape = 'u8[1024]{0}', space=vmem, size = 0x400, scoped, tag = 'input window, operand 3, single buffered']
    #allocation9 [shape = 's32[1]{0}', space=sflag, size = 0x4, scoped, tag = 'scoped memory for tpu_custom_call.1']
    #allocation10 [shape = 'u8[1024]{0}', space=vmem, size = 0x400, scoped, tag = 'input window, operand 4, single buffered']
    #allocation11 [shape = 'u8[4096]{0}', space=vmem, size = 0x1000, scoped, tag = 'output window, operand 0, single buffered']
    %11 = vsyncpa [#allocation3], 0
    %12 = vsyncpa [#allocation6], 0
    %13 = vsyncpa [#allocation9], 0
    %14 = vsyncpa [#allocation4], 0
    // Predicated region
    $region2: #{tpu_custom_call.1} parent=1 // pred_check
      _
    $region3: #{tpu_custom_call.1} parent=1 // pred_check_branch
      %16 = sbr.rel (0) target = $region5
    $region4: #{tpu_custom_call.1} parent=1 // pred_region
      %s18 = ssub.s32 128, 128
      %19 = vsyncadd [#allocation3], %s18
      %s21 = sshll.u32 [#allocation2], 4
      %s22 = int_to_ptr.vmem [resolvable:$true] %s21
      %24 = dma.hbm_to_vmem [thread:$0]  %s0, 128, %s22, [#allocation3]
    $region5: #{tpu_custom_call.1} parent=1 // pred_fallthru
      _
    // Predicated region
    $region6: #{tpu_custom_call.1} parent=1 // pred_check
      _
    $region7: #{tpu_custom_call.1} parent=1 // pred_check_branch
      %26 = sbr.rel (0) target = $region9
    $region8: #{tpu_custom_call.1} parent=1 // pred_region
      %s28 = ssub.s32 128, 128
      %29 = vsyncadd [#allocation6], %s28
      %s31 = sshll.u32 [#allocation5], 4
      %s32 = int_to_ptr.vmem [resolvable:$true] %s31
      %34 = dma.hbm_to_vmem [thread:$0]  %s1, 128, %s32, [#allocation6]
    $region9: #{tpu_custom_call.1} parent=1 // pred_fallthru
      _
    // Predicated region
    $region10: #{tpu_custom_call.1} parent=1 // pred_check
      _
    $region11: #{tpu_custom_call.1} parent=1 // pred_check_branch
      %36 = sbr.rel (0) target = $region13
    $region12: #{tpu_custom_call.1} parent=1 // pred_region
      %s38 = ssub.s32 256, 256
      %39 = vsyncadd [#allocation6], %s38
      %s40 = sshll.u32 [#allocation7], 4
      %s41 = int_to_ptr.vmem [resolvable:$true] %s40
      %46 = dma.hbm_to_vmem [thread:$0]  %s2, 256, %s41, [#allocation6], 128, 128, 8
    $region13: #{tpu_custom_call.1} parent=1 // pred_fallthru
      _
    // Predicated region
    $region14: #{tpu_custom_call.1} parent=1 // pred_check
      _
    $region15: #{tpu_custom_call.1} parent=1 // pred_check_branch
      %48 = sbr.rel (0) target = $region17
    $region16: #{tpu_custom_call.1} parent=1 // pred_region
      %s50 = ssub.s32 32, 32
      %51 = vsyncadd [#allocation9], %s50
      %s53 = sshll.u32 [#allocation8], 4
      %s54 = int_to_ptr.vmem [resolvable:$true] %s53
      %56 = dma.hbm_to_vmem [thread:$0]  %s3, 32, %s54, [#allocation9]
    $region17: #{tpu_custom_call.1} parent=1 // pred_fallthru
      _
    // Predicated region
    $region18: #{tpu_custom_call.1} parent=1 // pred_check
      _
    $region19: #{tpu_custom_call.1} parent=1 // pred_check_branch
      %58 = sbr.rel (0) target = $region21
    $region20: #{tpu_custom_call.1} parent=1 // pred_region
      %s60 = ssub.s32 32, 32
      %61 = vsyncadd [#allocation9], %s60
      %s63 = sshll.u32 [#allocation10], 4
      %s64 = int_to_ptr.vmem [resolvable:$true] %s63
      %66 = dma.hbm_to_vmem [thread:$0]  %s4, 32, %s64, [#allocation9]
    $region21: #{tpu_custom_call.1} parent=1 // pred_fallthru
      _
    // Predicated region
    $region22: #{tpu_custom_call.1} parent=1 // pred_check
      _
    $region23: #{tpu_custom_call.1} parent=1 // pred_check_branch
      %68 = sbr.rel (0) target = $region25
    $region24: #{tpu_custom_call.1} parent=1 // pred_region
      _
    $region25: #{tpu_custom_call.1} parent=1 // pred_fallthru
      _
    // Predicated region
    $region26: #{tpu_custom_call.1} parent=1 // pred_check
      _
    $region27: #{tpu_custom_call.1} parent=1 // pred_check_branch
      %70 = sbr.rel (0) target = $region29
    $region28: #{tpu_custom_call.1} parent=1 // pred_region
      %71 = dma.done [#allocation3], 128
    $region29: #{tpu_custom_call.1} parent=1 // pred_fallthru
      _
    // Predicated region
    $region30: #{tpu_custom_call.1} parent=1 // pred_check
      _
    $region31: #{tpu_custom_call.1} parent=1 // pred_check_branch
      %73 = sbr.rel (0) target = $region33
    $region32: #{tpu_custom_call.1} parent=1 // pred_region
      %74 = dma.done [#allocation6], 128
    $region33: #{tpu_custom_call.1} parent=1 // pred_fallthru
      _
    // Predicated region
    $region34: #{tpu_custom_call.1} parent=1 // pred_check
      _
    $region35: #{tpu_custom_call.1} parent=1 // pred_check_branch
      %76 = sbr.rel (0) target = $region37
    $region36: #{tpu_custom_call.1} parent=1 // pred_region
      %77 = dma.done [#allocation6], 256
    $region37: #{tpu_custom_call.1} parent=1 // pred_fallthru
      _
    // Predicated region
    $region38: #{tpu_custom_call.1} parent=1 // pred_check
      _
    $region39: #{tpu_custom_call.1} parent=1 // pred_check_branch
      %79 = sbr.rel (0) target = $region41
    $region40: #{tpu_custom_call.1} parent=1 // pred_region
      %80 = dma.done [#allocation9], 32
    $region41: #{tpu_custom_call.1} parent=1 // pred_fallthru
      _
    // Predicated region
    $region42: #{tpu_custom_call.1} parent=1 // pred_check
      _
    $region43: #{tpu_custom_call.1} parent=1 // pred_check_branch
      %82 = sbr.rel (0) target = $region45
    $region44: #{tpu_custom_call.1} parent=1 // pred_region
      %83 = dma.done [#allocation9], 32
    $region45: #{tpu_custom_call.1} parent=1 // pred_fallthru
      _
    %v84 = vld [vmem:[#allocation2] sm:$0xff]
    %v85 = vld [vmem:[#allocation5] sm:$0xff]
    %v86 = vld [vmem:[%s5] sm:$0xff]
    %v87 = vld [vmem:[#allocation7] sm:$0xff]
    %v88 = vld [vmem:[#allocation7 + $0x8] sm:$0xff]
    %vm89 = vcmask 130048
    %v91 = vsel %vm89, %v84, 0
    %v94 = vsel %vm89, %v87, 0
    %v97 = vsel %vm89, %v88, 0
    %99 = vmatprep.subr.mxu0 0.0
    %100 = vmatpush1.xpose.msra.mxu0 0.0
    %101 = vmatprep.subr.mxu0 0.0
    %102 = vmatpush1.xpose.msra.mxu0 0.0
    %103 = vmatprep.subr.mxu0 0.0
    %104 = vmatpush1.xpose.msra.mxu0 0.0
    %105 = vmatprep.subr.mxu0 0.0
    %106 = vmatpush1.xpose.msra.mxu0 0.0
    %107 = vmatprep.subr.mxu0 0.0
    %108 = vmatpush1.xpose.msra.mxu0 0.0
    %109 = vmatprep.subr.mxu0 0.0
    %110 = vmatpush1.xpose.msra.mxu0 0.0
    %111 = vmatprep.subr.mxu0 0.0
    %112 = vmatpush1.xpose.msra.mxu0 0.0
    %113 = vmatprep.subr.mxu0 0.0
    %114 = vmatpush1.xpose.msra.mxu0 0.0
    %115 = vmatprep.subr.mxu0 0.0
    %116 = vmatpush1.xpose.msra.mxu0 0.0
    %117 = vmatprep.subr.mxu0 0.0
    %118 = vmatpush1.xpose.msra.mxu0 0.0
    %119 = vmatprep.subr.mxu0 0.0
    %120 = vmatpush1.xpose.msra.mxu0 0.0
    %121 = vmatprep.subr.mxu0 0.0
    %122 = vmatpush1.xpose.msra.mxu0 0.0
    %123 = vmatprep.subr.mxu0 0.0
    %124 = vmatpush1.xpose.msra.mxu0 0.0
    %125 = vmatprep.subr.mxu0 0.0
    %126 = vmatpush1.xpose.msra.mxu0 0.0
    %127 = vmatprep.subr.mxu0 0.0
    %128 = vmatpush1.xpose.msra.mxu0 %v97
    %129 = vmatprep.subr.mxu0 0.0
    %130 = vmatpush1.xpose.msra.mxu0 %v94
    %131 = vmatprep.subr.mxu0 0.0
    %132 = vmatpush2.xpose.msra.mxu0 0.0
    %133 = vmatprep.subr.mxu0 0.0
    %134 = vmatpush2.xpose.msra.mxu0 0.0
    %135 = vmatprep.subr.mxu0 0.0
    %136 = vmatpush2.xpose.msra.mxu0 0.0
    %137 = vmatprep.subr.mxu0 0.0
    %138 = vmatpush2.xpose.msra.mxu0 0.0
    %139 = vmatprep.subr.mxu0 0.0
    %140 = vmatpush2.xpose.msra.mxu0 0.0
    %141 = vmatprep.subr.mxu0 0.0
    %142 = vmatpush2.xpose.msra.mxu0 0.0
    %143 = vmatprep.subr.mxu0 0.0
    %144 = vmatpush2.xpose.msra.mxu0 0.0
    %145 = vmatprep.subr.mxu0 0.0
    %146 = vmatpush2.xpose.msra.mxu0 0.0
    %147 = vmatprep.subr.mxu0 0.0
    %148 = vmatpush2.xpose.msra.mxu0 0.0
    %149 = vmatprep.subr.mxu0 0.0
    %150 = vmatpush2.xpose.msra.mxu0 0.0
    %151 = vmatprep.subr.mxu0 0.0
    %152 = vmatpush2.xpose.msra.mxu0 0.0
    %153 = vmatprep.subr.mxu0 0.0
    %154 = vmatpush2.xpose.msra.mxu0 0.0
    %155 = vmatprep.subr.mxu0 0.0
    %156 = vmatpush2.xpose.msra.mxu0 0.0
    %157 = vmatprep.subr.mxu0 0.0
    %158 = vmatpush2.xpose.msra.mxu0 0.0
    %159 = vmatprep.subr.mxu0 0.0
    %160 = vmatpush2.xpose.msra.mxu0 0.0
    %161 = vmatprep.subr.mxu0 0.0
    %162 = vmatpush2.xpose.msra.mxu0 0.0
    %163 = vmatprep.mubr.f32.mxu0 0.0
    %164 = vmatmul.mubr.f32.gmra.mxu0 %v91
    %v165 = vpop.f32.mrf.mxu0
    %v166 = vadd.f32 0.0, %v165
    %v167 = vpop.f32.mrf.mxu0
    %168 = vdwg.mxu0
    %v169 = vld [vmem:[#allocation8] sm:$0x3]
    %v171 = vsel %vm89, %v169, 0
    %173 = vmatprep.subr.mxu0 0.0
    %174 = vmatpush1.xpose.msra.mxu0 0.0
    %175 = vmatprep.subr.mxu0 0.0
    %176 = vmatpush1.xpose.msra.mxu0 0.0
    %177 = vmatprep.subr.mxu0 0.0
    %178 = vmatpush1.xpose.msra.mxu0 0.0
    %179 = vmatprep.subr.mxu0 0.0
    %180 = vmatpush1.xpose.msra.mxu0 0.0
    %181 = vmatprep.subr.mxu0 0.0
    %182 = vmatpush1.xpose.msra.mxu0 0.0
    %183 = vmatprep.subr.mxu0 0.0
    %184 = vmatpush1.xpose.msra.mxu0 0.0
    %185 = vmatprep.subr.mxu0 0.0
    %186 = vmatpush1.xpose.msra.mxu0 0.0
    %187 = vmatprep.subr.mxu0 0.0
    %188 = vmatpush1.xpose.msra.mxu0 0.0
    %189 = vmatprep.subr.mxu0 0.0
    %190 = vmatpush1.xpose.msra.mxu0 0.0
    %191 = vmatprep.subr.mxu0 0.0
    %192 = vmatpush1.xpose.msra.mxu0 0.0
    %193 = vmatprep.subr.mxu0 0.0
    %194 = vmatpush1.xpose.msra.mxu0 0.0
    %195 = vmatprep.subr.mxu0 0.0
    %196 = vmatpush1.xpose.msra.mxu0 0.0
    %197 = vmatprep.subr.mxu0 0.0
    %198 = vmatpush1.xpose.msra.mxu0 0.0
    %199 = vmatprep.subr.mxu0 0.0
    %200 = vmatpush1.xpose.msra.mxu0 0.0
    %201 = vmatprep.subr.mxu0 0.0
    %202 = vmatpush1.xpose.msra.mxu0 0.0
    %203 = vmatprep.subr.mxu0 0.0
    %204 = vmatpush1.xpose.msra.mxu0 %v91
    %205 = vmatprep.subr.mxu0 0.0
    %206 = vmatpush2.xpose.msra.mxu0 0.0
    %207 = vmatprep.subr.mxu0 0.0
    %208 = vmatpush2.xpose.msra.mxu0 0.0
    %209 = vmatprep.subr.mxu0 0.0
    %210 = vmatpush2.xpose.msra.mxu0 0.0
    %211 = vmatprep.subr.mxu0 0.0
    %212 = vmatpush2.xpose.msra.mxu0 0.0
    %213 = vmatprep.subr.mxu0 0.0
    %214 = vmatpush2.xpose.msra.mxu0 0.0
    %215 = vmatprep.subr.mxu0 0.0
    %216 = vmatpush2.xpose.msra.mxu0 0.0
    %217 = vmatprep.subr.mxu0 0.0
    %218 = vmatpush2.xpose.msra.mxu0 0.0
    %219 = vmatprep.subr.mxu0 0.0
    %220 = vmatpush2.xpose.msra.mxu0 0.0
    %221 = vmatprep.subr.mxu0 0.0
    %222 = vmatpush2.xpose.msra.mxu0 0.0
    %223 = vmatprep.subr.mxu0 0.0
    %224 = vmatpush2.xpose.msra.mxu0 0.0
    %225 = vmatprep.subr.mxu0 0.0
    %226 = vmatpush2.xpose.msra.mxu0 0.0
    %227 = vmatprep.subr.mxu0 0.0
    %228 = vmatpush2.xpose.msra.mxu0 0.0
    %229 = vmatprep.subr.mxu0 0.0
    %230 = vmatpush2.xpose.msra.mxu0 0.0
    %231 = vmatprep.subr.mxu0 0.0
    %232 = vmatpush2.xpose.msra.mxu0 0.0
    %233 = vmatprep.subr.mxu0 0.0
    %234 = vmatpush2.xpose.msra.mxu0 0.0
    %235 = vmatprep.subr.mxu0 0.0
    %236 = vmatpush2.xpose.msra.mxu0 0.0
    %237 = vmatprep.mubr.f32.mxu0 0.0
    %238 = vmatmul.mubr.f32.gmra.mxu0 %v171
    %v239 = vpop.f32.mrf.mxu0
    %v240 = vadd.f32 0.0, %v239
    %v241 = vpop.f32.mrf.mxu0
    %242 = vdwg.mxu0
    %v243 = vld [vmem:[#allocation10] sm:$0x3]
    %v245 = vsel %vm89, %v85, 0
    %v248 = vsel %vm89, %v243, 0
    %250 = vmatprep.subr.mxu0 0.0
    %251 = vmatpush1.xpose.msra.mxu0 0.0
    %252 = vmatprep.subr.mxu0 0.0
    %253 = vmatpush1.xpose.msra.mxu0 0.0
    %254 = vmatprep.subr.mxu0 0.0
    %255 = vmatpush1.xpose.msra.mxu0 0.0
    %256 = vmatprep.subr.mxu0 0.0
    %257 = vmatpush1.xpose.msra.mxu0 0.0
    %258 = vmatprep.subr.mxu0 0.0
    %259 = vmatpush1.xpose.msra.mxu0 0.0
    %260 = vmatprep.subr.mxu0 0.0
    %261 = vmatpush1.xpose.msra.mxu0 0.0
    %262 = vmatprep.subr.mxu0 0.0
    %263 = vmatpush1.xpose.msra.mxu0 0.0
    %264 = vmatprep.subr.mxu0 0.0
    %265 = vmatpush1.xpose.msra.mxu0 0.0
    %266 = vmatprep.subr.mxu0 0.0
    %267 = vmatpush1.xpose.msra.mxu0 0.0
    %268 = vmatprep.subr.mxu0 0.0
    %269 = vmatpush1.xpose.msra.mxu0 0.0
    %270 = vmatprep.subr.mxu0 0.0
    %271 = vmatpush1.xpose.msra.mxu0 0.0
    %272 = vmatprep.subr.mxu0 0.0
    %273 = vmatpush1.xpose.msra.mxu0 0.0
    %274 = vmatprep.subr.mxu0 0.0
    %275 = vmatpush1.xpose.msra.mxu0 0.0
    %276 = vmatprep.subr.mxu0 0.0
    %277 = vmatpush1.xpose.msra.mxu0 0.0
    %278 = vmatprep.subr.mxu0 0.0
    %279 = vmatpush1.xpose.msra.mxu0 0.0
    %280 = vmatprep.subr.mxu0 0.0
    %281 = vmatpush1.xpose.msra.mxu0 %v248
    %282 = vmatprep.subr.mxu0 0.0
    %283 = vmatpush2.xpose.msra.mxu0 0.0
    %284 = vmatprep.subr.mxu0 0.0
    %285 = vmatpush2.xpose.msra.mxu0 0.0
    %286 = vmatprep.subr.mxu0 0.0
    %287 = vmatpush2.xpose.msra.mxu0 0.0
    %288 = vmatprep.subr.mxu0 0.0
    %289 = vmatpush2.xpose.msra.mxu0 0.0
    %290 = vmatprep.subr.mxu0 0.0
    %291 = vmatpush2.xpose.msra.mxu0 0.0
    %292 = vmatprep.subr.mxu0 0.0
    %293 = vmatpush2.xpose.msra.mxu0 0.0
    %294 = vmatprep.subr.mxu0 0.0
    %295 = vmatpush2.xpose.msra.mxu0 0.0
    %296 = vmatprep.subr.mxu0 0.0
    %297 = vmatpush2.xpose.msra.mxu0 0.0
    %298 = vmatprep.subr.mxu0 0.0
    %299 = vmatpush2.xpose.msra.mxu0 0.0
    %300 = vmatprep.subr.mxu0 0.0
    %301 = vmatpush2.xpose.msra.mxu0 0.0
    %302 = vmatprep.subr.mxu0 0.0
    %303 = vmatpush2.xpose.msra.mxu0 0.0
    %304 = vmatprep.subr.mxu0 0.0
    %305 = vmatpush2.xpose.msra.mxu0 0.0
    %306 = vmatprep.subr.mxu0 0.0
    %307 = vmatpush2.xpose.msra.mxu0 0.0
    %308 = vmatprep.subr.mxu0 0.0
    %309 = vmatpush2.xpose.msra.mxu0 0.0
    %310 = vmatprep.subr.mxu0 0.0
    %311 = vmatpush2.xpose.msra.mxu0 0.0
    %312 = vmatprep.subr.mxu0 0.0
    %313 = vmatpush2.xpose.msra.mxu0 0.0
    %314 = vmatprep.mubr.f32.mxu0 0.0
    %315 = vmatmul.mubr.f32.gmra.mxu0 %v245
    %v316 = vpop.f32.mrf.mxu0
    %v317 = vadd.f32 0.0, %v316
    %v318 = vpop.f32.mrf.mxu0
    %319 = vdwg.mxu0
    %v320 = vsub.f32 %v86, 1.0
    %v321 = vmul.f32 %v320, 1e+30
    %323 = vset.pattern.permute.xlu0 0
    %324 = vperm.xlu0 %323, %v317
    %v325 = vpop.permute.xlu0 %324
    %v327 = vlaneseq
    %v328 = vshrl.u32 %v327, 7
    %v329 = vsub.s32 0, %v328
    %v330 = vrot.slane %v240, %v329
    %v331 = vadd.f32 %v325, %v330
    %v332 = vmul.f32 %v331, 0.01
    %v333 = vmax.f32 %v331, %v332
    %v334 = vadd.f32 %v333, %v321
    %vm335 = vcmask 64512
    %v336 = vsel %vm335, %v334, -inf
    %337 = vmax.xlane.f32.xlu0 %v336
    %v338 = vpop.xlane.xlu0 %337
    %v339 = vsub.f32 %v333, %v338
    %v340 = vmin.f32 %v339, 0.0
    %v341 = vmul.f32 %v340, 1.442695
    %v342 = vpow.pop %v341
    %v343 = vmul.f32 %v86, %v342
    %v344 = vsel %vm335, %v343, 0.0
    %345 = vadd.xlane.f32.xlu0 %v344
    %v346 = vpop.xlane.xlu0 %345
    %v347 = vmax.f32 %v346, 1e-30
    %v349 = vsel %vm335, %v343, 0
    %351 = vmatprep.subr.mxu0 0.0
    %352 = vmatpush1.msra.mxu0 0.0
    %353 = vmatprep.subr.mxu0 0.0
    %354 = vmatpush1.msra.mxu0 0.0
    %355 = vmatprep.subr.mxu0 0.0
    %356 = vmatpush1.msra.mxu0 0.0
    %357 = vmatprep.subr.mxu0 0.0
    %358 = vmatpush1.msra.mxu0 0.0
    %359 = vmatprep.subr.mxu0 0.0
    %360 = vmatpush1.msra.mxu0 0.0
    %361 = vmatprep.subr.mxu0 0.0
    %362 = vmatpush1.msra.mxu0 0.0
    %363 = vmatprep.subr.mxu0 0.0
    %364 = vmatpush1.msra.mxu0 0.0
    %365 = vmatprep.subr.mxu0 0.0
    %366 = vmatpush1.msra.mxu0 0.0
    %367 = vmatprep.subr.mxu0 0.0
    %368 = vmatpush1.msra.mxu0 0.0
    %369 = vmatprep.subr.mxu0 0.0
    %370 = vmatpush1.msra.mxu0 0.0
    %371 = vmatprep.subr.mxu0 0.0
    %372 = vmatpush1.msra.mxu0 0.0
    %373 = vmatprep.subr.mxu0 0.0
    %374 = vmatpush1.msra.mxu0 0.0
    %375 = vmatprep.subr.mxu0 0.0
    %376 = vmatpush1.msra.mxu0 0.0
    %377 = vmatprep.subr.mxu0 0.0
    %378 = vmatpush1.msra.mxu0 0.0
    %379 = vmatprep.subr.mxu0 0.0
    %380 = vmatpush1.msra.mxu0 0.0
    %381 = vmatprep.subr.mxu0 0.0
    %382 = vmatpush1.msra.mxu0 %v166
    %383 = vmatprep.subr.mxu0 0.0
    %384 = vmatpush2.msra.mxu0 0.0
    %385 = vmatprep.subr.mxu0 0.0
    %386 = vmatpush2.msra.mxu0 0.0
    %387 = vmatprep.subr.mxu0 0.0
    %388 = vmatpush2.msra.mxu0 0.0
    %389 = vmatprep.subr.mxu0 0.0
    %390 = vmatpush2.msra.mxu0 0.0
    %391 = vmatprep.subr.mxu0 0.0
    %392 = vmatpush2.msra.mxu0 0.0
    %393 = vmatprep.subr.mxu0 0.0
    %394 = vmatpush2.msra.mxu0 0.0
    %395 = vmatprep.subr.mxu0 0.0
    %396 = vmatpush2.msra.mxu0 0.0
    %397 = vmatprep.subr.mxu0 0.0
    %398 = vmatpush2.msra.mxu0 0.0
    %399 = vmatprep.subr.mxu0 0.0
    %400 = vmatpush2.msra.mxu0 0.0
    %401 = vmatprep.subr.mxu0 0.0
    %402 = vmatpush2.msra.mxu0 0.0
    %403 = vmatprep.subr.mxu0 0.0
    %404 = vmatpush2.msra.mxu0 0.0
    %405 = vmatprep.subr.mxu0 0.0
    %406 = vmatpush2.msra.mxu0 0.0
    %407 = vmatprep.subr.mxu0 0.0
    %408 = vmatpush2.msra.mxu0 0.0
    %409 = vmatprep.subr.mxu0 0.0
    %410 = vmatpush2.msra.mxu0 0.0
    %411 = vmatprep.subr.mxu0 0.0
    %412 = vmatpush2.msra.mxu0 0.0
    %413 = vmatprep.subr.mxu0 0.0
    %414 = vmatpush2.msra.mxu0 0.0
    %415 = vmatprep.mubr.f32.mxu0 0.0
    %416 = vmatmul.mubr.f32.gmra.mxu0 %v349
    %v417 = vpop.f32.mrf.mxu0
    %v418 = vadd.f32 0.0, %v417
    %v419 = vpop.f32.mrf.mxu0
    %420 = vdwg.mxu0
    %v421 = vrcp.pop %v347
    %v422 = vmul.f32 %v347, %v421
    %v423 = vsub.f32 2.0, %v422
    %v424 = vmul.f32 %v421, %v423
    %v425 = vmul.f32 %v418, %v424
    %426 = vst.msk [vmem:[#allocation11] sm:$0xff] %vm335, %v425
    %427 = vset.pattern.permute.xlu0 1
    %428 = vperm.xlu0 %427, %v317
    %v429 = vpop.permute.xlu0 %428
    %v431 = vlaneseq
    %v432 = vshrl.u32 %v431, 7
    %v433 = vsub.s32 1, %v432
    %v434 = vrot.slane %v240, %v433
    %v435 = vadd.f32 %v429, %v434
    %v436 = vmul.f32 %v435, 0.01
    %v437 = vmax.f32 %v435, %v436
    %v438 = vadd.f32 %v437, %v321
    %v439 = vsel %vm335, %v438, -inf
    %440 = vmax.xlane.f32.xlu0 %v439
    %v441 = vpop.xlane.xlu0 %440
    %v442 = vsub.f32 %v437, %v441
    %v443 = vmin.f32 %v442, 0.0
    %v444 = vmul.f32 %v443, 1.442695
    %v445 = vpow.pop %v444
    %v446 = vmul.f32 %v86, %v445
    %v447 = vsel %vm335, %v446, 0.0
    %448 = vadd.xlane.f32.xlu0 %v447
    %v449 = vpop.xlane.xlu0 %448
    %v450 = vmax.f32 %v449, 1e-30
    %452 = vrot.lane.b32.xlu0 %v166, 120
    %v453 = vpop.permute.xlu0 %452
    %v456 = vsel %vm335, %v446, 0
    %458 = vmatprep.subr.mxu0 0.0
    %459 = vmatpush1.msra.mxu0 0.0
    %460 = vmatprep.subr.mxu0 0.0
    %461 = vmatpush1.msra.mxu0 0.0
    %462 = vmatprep.subr.mxu0 0.0
    %463 = vmatpush1.msra.mxu0 0.0
    %464 = vmatprep.subr.mxu0 0.0
    %465 = vmatpush1.msra.mxu0 0.0
    %466 = vmatprep.subr.mxu0 0.0
    %467 = vmatpush1.msra.mxu0 0.0
    %468 = vmatprep.subr.mxu0 0.0
    %469 = vmatpush1.msra.mxu0 0.0
    %470 = vmatprep.subr.mxu0 0.0
    %471 = vmatpush1.msra.mxu0 0.0
    %472 = vmatprep.subr.mxu0 0.0
    %473 = vmatpush1.msra.mxu0 0.0
    %474 = vmatprep.subr.mxu0 0.0
    %475 = vmatpush1.msra.mxu0 0.0
    %476 = vmatprep.subr.mxu0 0.0
    %477 = vmatpush1.msra.mxu0 0.0
    %478 = vmatprep.subr.mxu0 0.0
    %479 = vmatpush1.msra.mxu0 0.0
    %480 = vmatprep.subr.mxu0 0.0
    %481 = vmatpush1.msra.mxu0 0.0
    %482 = vmatprep.subr.mxu0 0.0
    %483 = vmatpush1.msra.mxu0 0.0
    %484 = vmatprep.subr.mxu0 0.0
    %485 = vmatpush1.msra.mxu0 0.0
    %486 = vmatprep.subr.mxu0 0.0
    %487 = vmatpush1.msra.mxu0 0.0
    %488 = vmatprep.subr.mxu0 0.0
    %489 = vmatpush1.msra.mxu0 %v453
    %490 = vmatprep.subr.mxu0 0.0
    %491 = vmatpush2.msra.mxu0 0.0
    %492 = vmatprep.subr.mxu0 0.0
    %493 = vmatpush2.msra.mxu0 0.0
    %494 = vmatprep.subr.mxu0 0.0
    %495 = vmatpush2.msra.mxu0 0.0
    %496 = vmatprep.subr.mxu0 0.0
    %497 = vmatpush2.msra.mxu0 0.0
    %498 = vmatprep.subr.mxu0 0.0
    %499 = vmatpush2.msra.mxu0 0.0
    %500 = vmatprep.subr.mxu0 0.0
    %501 = vmatpush2.msra.mxu0 0.0
    %502 = vmatprep.subr.mxu0 0.0
    %503 = vmatpush2.msra.mxu0 0.0
    %504 = vmatprep.subr.mxu0 0.0
    %505 = vmatpush2.msra.mxu0 0.0
    %506 = vmatprep.subr.mxu0 0.0
    %507 = vmatpush2.msra.mxu0 0.0
    %508 = vmatprep.subr.mxu0 0.0
    %509 = vmatpush2.msra.mxu0 0.0
    %510 = vmatprep.subr.mxu0 0.0
    %511 = vmatpush2.msra.mxu0 0.0
    %512 = vmatprep.subr.mxu0 0.0
    %513 = vmatpush2.msra.mxu0 0.0
    %514 = vmatprep.subr.mxu0 0.0
    %515 = vmatpush2.msra.mxu0 0.0
    %516 = vmatprep.subr.mxu0 0.0
    %517 = vmatpush2.msra.mxu0 0.0
    %518 = vmatprep.subr.mxu0 0.0
    %519 = vmatpush2.msra.mxu0 0.0
    %520 = vmatprep.subr.mxu0 0.0
    %521 = vmatpush2.msra.mxu0 0.0
    %522 = vmatprep.mubr.f32.mxu0 0.0
    %523 = vmatmul.mubr.f32.gmra.mxu0 %v456
    %v524 = vpop.f32.mrf.mxu0
    %v525 = vadd.f32 0.0, %v524
    %v526 = vpop.f32.mrf.mxu0
    %527 = vdwg.mxu0
    %v528 = vrcp.pop %v450
    %v529 = vmul.f32 %v450, %v528
    %v530 = vsub.f32 2.0, %v529
    %v531 = vmul.f32 %v528, %v530
    %v532 = vmul.f32 %v525, %v531
    %534 = vrot.lane.b32.xlu0 %v532, 8
    %v535 = vpop.permute.xlu0 %534
    %vm537 = vcmask 130112
    %538 = vst.msk [vmem:[#allocation11] sm:$0xff] %vm537, %v535
    // Predicated region
    $region46: #{tpu_custom_call.1} parent=1 // pred_check
      _
    $region47: #{tpu_custom_call.1} parent=1 // pred_check_branch
      %540 = sbr.rel (0) target = $region49
    $region48: #{tpu_custom_call.1} parent=1 // pred_region
      %s542 = ssub.s32 128, 128
      %543 = vsyncadd [#allocation4], %s542
      %s545 = sshll.u32 [#allocation11], 4
      %s546 = int_to_ptr.vmem [resolvable:$true] %s545
      %548 = dma.vmem_to_hbm [thread:$0]  %s546, 128, %s6, [#allocation4]
    $region49: #{tpu_custom_call.1} parent=1 // pred_fallthru
      _
    // Predicated region
    $region50: #{tpu_custom_call.1} parent=1 // pred_check
      _
    $region51: #{tpu_custom_call.1} parent=1 // pred_check_branch
      %550 = sbr.rel (0) target = $region53
    $region52: #{tpu_custom_call.1} parent=1 // pred_region
      %551 = dma.done [#allocation4], 128
    $region53: #{tpu_custom_call.1} parent=1 // pred_fallthru
      _
    %552 = vsyncpa [#allocation3], 1
    %553 = vsyncpa [#allocation6], 1
    %554 = vsyncpa [#allocation9], 1
    %555 = vsyncpa [#allocation4], 1

</llo_original>
